<compile_context>
chip_gen: v5e
topology: v5e:2x2
jax: 0.10.0
libtpu: 0.0.40
codegen_flags: <defaults>
</compile_context>

<pallas_src>
import jax
import jax.numpy as jnp
from jax.experimental import pallas as pl
from jax.experimental.pallas import tpu as pltpu

HIDDEN = 32
N_OUT = 2
LANES = 128
STRIP = 8  # sublanes per register-resident strip (one f32 vreg)


def _round_up(n, m):
    return ((n + m - 1) // m) * m


def dqn_kernel(x_ref, w1_ref, b1_ref, w2_ref, b2_ref, out_ref):
    """VPU-only forward over one (tr, 128) batch tile.

    x_ref   : (tr, 128) f32 VMEM tile; batch on (sublane, lane).
    w1_ref  : (32,)  f32 SMEM   (hidden weights, in->out layout)
    b1_ref  : (32,)  f32 SMEM
    w2_ref  : (64,)  f32 SMEM   row-major: w2[j, k] at index 2*j + k
    b2_ref  : (2,)   f32 SMEM
    out_ref : (2, tr, 128) f32 VMEM; out_ref[k] = Q_k per batch element.
    """
    n_strips = x_ref.shape[0] // STRIP
    b2_0 = b2_ref[0]
    b2_1 = b2_ref[1]

    # Strip loop: x, acc0, acc1 live in vregs across all 32 hidden units;
    # exactly one load and two stores per strip.
    @pl.loop(0, n_strips)
    def _(s):
        r0 = pl.multiple_of(s * STRIP, STRIP)
        x = x_ref[pl.ds(r0, STRIP), :]
        acc0 = jnp.zeros_like(x)
        acc1 = jnp.zeros_like(x)
        for j in range(HIDDEN):  # fully unrolled: pure VALU work, no MXU/XLU
            h = jnp.maximum(x * w1_ref[j] + b1_ref[j], 0.0)
            acc0 = acc0 + h * w2_ref[2 * j]
            acc1 = acc1 + h * w2_ref[2 * j + 1]
        out_ref[0, pl.ds(r0, STRIP), :] = acc0 + b2_0
        out_ref[1, pl.ds(r0, STRIP), :] = acc1 + b2_1


def dqn_forward(x, w1, b1, w2, b2, *, block_rows=2048):
    """x: (B, 1) float32. Returns (B, 2) float32 Q-values."""
    B = x.shape[0]
    rows = pl.cdiv(B, LANES)               # rows of the lane-dense layout
    rows8 = _round_up(max(rows, 1), STRIP)  # (8,128)-aligned sublane count

    # Tile rows: multiple of 8; when there is enough work, force >= 2 grid
    # steps so both v7x TensorCores participate.
    if rows8 >= 2 * STRIP:
        tr = min(block_rows, _round_up(pl.cdiv(rows8, 2), STRIP))
    else:
        tr = rows8
    num_tiles = pl.cdiv(rows8, tr)
    rows_pad = num_tiles * tr
    total = rows_pad * LANES

    xf = x.reshape(-1)
    if total != B:                          # skip the pad pass when exact fit
        xf = jnp.pad(xf, (0, total - B))
    x2 = xf.reshape(rows_pad, LANES)        # batch mapped to the 128-lane axis

    smem = pl.BlockSpec(memory_space=pltpu.MemorySpace.SMEM)
    out = pl.pallas_call(
        dqn_kernel,
        out_shape=jax.ShapeDtypeStruct((N_OUT, rows_pad, LANES), jnp.float32),
        grid=(num_tiles,),
        in_specs=[
            pl.BlockSpec((tr, LANES), lambda i: (i, 0)),
            smem,  # w1 (32,)
            smem,  # b1 (32,)
            smem,  # w2 (64,)
            smem,  # b2 (2,)
        ],
        out_specs=pl.BlockSpec((N_OUT, tr, LANES), lambda i: (0, i, 0)),
        compiler_params=pltpu.CompilerParams(
            dimension_semantics=("parallel",)),
    )(x2, w1.reshape(-1), b1.reshape(-1), w2.reshape(-1), b2.reshape(-1))

    # (2, rows_pad, 128) lane-dense slabs -> (B, 2)
    return jnp.stack([out[0].reshape(-1)[:B], out[1].reshape(-1)[:B]], axis=1)


def init_params(key):
    """nn.Linear-shaped params, stored as (in, out):
       fc[0]: Linear(1, 32), fc[2]: Linear(32, 2)."""
    k1, k2, k3, k4 = jax.random.split(key, 4)
    # PyTorch default init: U(-1/sqrt(fan_in), 1/sqrt(fan_in))
    lim1 = 1.0 / jnp.sqrt(1.0)
    lim2 = 1.0 / jnp.sqrt(32.0)
    w1 = jax.random.uniform(k1, (1, HIDDEN), jnp.float32, -lim1, lim1)
    b1 = jax.random.uniform(k2, (HIDDEN,), jnp.float32, -lim1, lim1)
    w2 = jax.random.uniform(k3, (HIDDEN, N_OUT), jnp.float32, -lim2, lim2)
    b2 = jax.random.uniform(k4, (N_OUT,), jnp.float32, -lim2, lim2)
    return w1, b1, w2, b2


def reference_forward(x, w1, b1, w2, b2):
    h = jnp.maximum(x @ w1 + b1, 0.0)
    return h @ w2 + b2


if __name__ == "__main__":
    key = jax.random.PRNGKey(0)
    kx, kp = jax.random.split(key)

    batch = 8
    # DQN state input: (batch, 1) — single scalar observation per sample.
    x = jax.random.normal(kx, (batch, 1), jnp.float32)
    w1, b1, w2, b2 = init_params(kp)

    out = dqn_forward(x, w1, b1, w2, b2)
    out = jax.block_until_ready(out)

    ref = reference_forward(x, w1, b1, w2, b2)
    assert out.shape == (batch, N_OUT), out.shape
    assert jnp.allclose(out, ref, atol=1e-5, rtol=1e-5), "mismatch vs reference"

    # Sanity: also exercise a multi-tile grid (>= 2 tiles, 8-aligned rows).
    big = 4096
    xb = jax.random.normal(kx, (big, 1), jnp.float32)
    outb = jax.block_until_ready(dqn_forward(xb, w1, b1, w2, b2))
    refb = reference_forward(xb, w1, b1, w2, b2)
    assert jnp.allclose(outb, refb, atol=1e-5, rtol=1e-5), "mismatch (big batch)"

    print("KERNEL_OK")
</pallas_src>

<mosaic_0001>
module attributes {stable_mosaic.version = 11 : i64} {
  func.func @dqn_kernel(%arg0: i32, %arg1: memref<8x128xf32, #tpu.memory_space<vmem>>, %arg2: memref<32xf32, #tpu.memory_space<smem>>, %arg3: memref<32xf32, #tpu.memory_space<smem>>, %arg4: memref<64xf32, #tpu.memory_space<smem>>, %arg5: memref<2xf32, #tpu.memory_space<smem>>, %arg6: memref<2x8x128xf32, #tpu.memory_space<vmem>>) attributes {dimension_semantics = [#tpu.dimension_semantics<parallel>], iteration_bounds = array<i64: 1>, scalar_prefetch = 0 : i64, scratch_operands = 0 : i64, tpu.core_type = #tpu.core_type<tc>, window_params = [{transform_indices = @transform_0, window_bounds = array<i64: 8, 128>}, {transform_indices = @transform_1, window_bounds = array<i64: 32>}, {transform_indices = @transform_2, window_bounds = array<i64: 32>}, {transform_indices = @transform_3, window_bounds = array<i64: 64>}, {transform_indices = @transform_4, window_bounds = array<i64: 2>}, {transform_indices = @transform_5, window_bounds = array<i64: 2, 8, 128>}]} {
    %c0 = arith.constant 0 : index
    %0 = memref.load %arg5[%c0] : memref<2xf32, #tpu.memory_space<smem>>
    %c1 = arith.constant 1 : index
    %1 = memref.load %arg5[%c1] : memref<2xf32, #tpu.memory_space<smem>>
    %c0_i32 = arith.constant 0 : i32
    %c1_i32 = arith.constant 1 : i32
    %2 = arith.muli %c0_i32, %c1_i32 : i32
    %c0_i32_0 = arith.constant 0 : i32
    %3 = arith.addi %c0_i32_0, %2 : i32
    %c8_i32 = arith.constant 8 : i32
    %4 = arith.muli %3, %c8_i32 : i32
    %5 = tpu.assume_multiple %4, 8 : i32
    %6 = arith.index_cast %5 : i32 to index
    %c0_1 = arith.constant 0 : index
    %7 = vector.load %arg1[%6, %c0_1] : memref<8x128xf32, #tpu.memory_space<vmem>>, vector<8x128xf32>
    %cst = arith.constant 0.000000e+00 : f32
    %8 = vector.broadcast %cst : f32 to vector<8x128xf32>
    %cst_2 = arith.constant 0.000000e+00 : f32
    %9 = vector.broadcast %cst_2 : f32 to vector<8x128xf32>
    %c0_3 = arith.constant 0 : index
    %10 = memref.load %arg2[%c0_3] : memref<32xf32, #tpu.memory_space<smem>>
    %11 = vector.broadcast %10 : f32 to vector<8x128xf32>
    %12 = arith.mulf %7, %11 : vector<8x128xf32>
    %c0_4 = arith.constant 0 : index
    %13 = memref.load %arg3[%c0_4] : memref<32xf32, #tpu.memory_space<smem>>
    %14 = vector.broadcast %13 : f32 to vector<8x128xf32>
    %15 = arith.addf %12, %14 : vector<8x128xf32>
    %cst_5 = arith.constant 0.000000e+00 : f32
    %16 = vector.broadcast %cst_5 : f32 to vector<8x128xf32>
    %17 = arith.maximumf %15, %16 : vector<8x128xf32>
    %c0_6 = arith.constant 0 : index
    %18 = memref.load %arg4[%c0_6] : memref<64xf32, #tpu.memory_space<smem>>
    %19 = vector.broadcast %18 : f32 to vector<8x128xf32>
    %20 = arith.mulf %17, %19 : vector<8x128xf32>
    %21 = arith.addf %8, %20 : vector<8x128xf32>
    %c1_7 = arith.constant 1 : index
    %22 = memref.load %arg4[%c1_7] : memref<64xf32, #tpu.memory_space<smem>>
    %23 = vector.broadcast %22 : f32 to vector<8x128xf32>
    %24 = arith.mulf %17, %23 : vector<8x128xf32>
    %25 = arith.addf %9, %24 : vector<8x128xf32>
    %c1_8 = arith.constant 1 : index
    %26 = memref.load %arg2[%c1_8] : memref<32xf32, #tpu.memory_space<smem>>
    %27 = vector.broadcast %26 : f32 to vector<8x128xf32>
    %28 = arith.mulf %7, %27 : vector<8x128xf32>
    %c1_9 = arith.constant 1 : index
    %29 = memref.load %arg3[%c1_9] : memref<32xf32, #tpu.memory_space<smem>>
    %30 = vector.broadcast %29 : f32 to vector<8x128xf32>
    %31 = arith.addf %28, %30 : vector<8x128xf32>
    %cst_10 = arith.constant 0.000000e+00 : f32
    %32 = vector.broadcast %cst_10 : f32 to vector<8x128xf32>
    %33 = arith.maximumf %31, %32 : vector<8x128xf32>
    %c2 = arith.constant 2 : index
    %34 = memref.load %arg4[%c2] : memref<64xf32, #tpu.memory_space<smem>>
    %35 = vector.broadcast %34 : f32 to vector<8x128xf32>
    %36 = arith.mulf %33, %35 : vector<8x128xf32>
    %37 = arith.addf %21, %36 : vector<8x128xf32>
    %c3 = arith.constant 3 : index
    %38 = memref.load %arg4[%c3] : memref<64xf32, #tpu.memory_space<smem>>
    %39 = vector.broadcast %38 : f32 to vector<8x128xf32>
    %40 = arith.mulf %33, %39 : vector<8x128xf32>
    %41 = arith.addf %25, %40 : vector<8x128xf32>
    %c2_11 = arith.constant 2 : index
    %42 = memref.load %arg2[%c2_11] : memref<32xf32, #tpu.memory_space<smem>>
    %43 = vector.broadcast %42 : f32 to vector<8x128xf32>
    %44 = arith.mulf %7, %43 : vector<8x128xf32>
    %c2_12 = arith.constant 2 : index
    %45 = memref.load %arg3[%c2_12] : memref<32xf32, #tpu.memory_space<smem>>
    %46 = vector.broadcast %45 : f32 to vector<8x128xf32>
    %47 = arith.addf %44, %46 : vector<8x128xf32>
    %cst_13 = arith.constant 0.000000e+00 : f32
    %48 = vector.broadcast %cst_13 : f32 to vector<8x128xf32>
    %49 = arith.maximumf %47, %48 : vector<8x128xf32>
    %c4 = arith.constant 4 : index
    %50 = memref.load %arg4[%c4] : memref<64xf32, #tpu.memory_space<smem>>
    %51 = vector.broadcast %50 : f32 to vector<8x128xf32>
    %52 = arith.mulf %49, %51 : vector<8x128xf32>
    %53 = arith.addf %37, %52 : vector<8x128xf32>
    %c5 = arith.constant 5 : index
    %54 = memref.load %arg4[%c5] : memref<64xf32, #tpu.memory_space<smem>>
    %55 = vector.broadcast %54 : f32 to vector<8x128xf32>
    %56 = arith.mulf %49, %55 : vector<8x128xf32>
    %57 = arith.addf %41, %56 : vector<8x128xf32>
    %c3_14 = arith.constant 3 : index
    %58 = memref.load %arg2[%c3_14] : memref<32xf32, #tpu.memory_space<smem>>
    %59 = vector.broadcast %58 : f32 to vector<8x128xf32>
    %60 = arith.mulf %7, %59 : vector<8x128xf32>
    %c3_15 = arith.constant 3 : index
    %61 = memref.load %arg3[%c3_15] : memref<32xf32, #tpu.memory_space<smem>>
    %62 = vector.broadcast %61 : f32 to vector<8x128xf32>
    %63 = arith.addf %60, %62 : vector<8x128xf32>
    %cst_16 = arith.constant 0.000000e+00 : f32
    %64 = vector.broadcast %cst_16 : f32 to vector<8x128xf32>
    %65 = arith.maximumf %63, %64 : vector<8x128xf32>
    %c6 = arith.constant 6 : index
    %66 = memref.load %arg4[%c6] : memref<64xf32, #tpu.memory_space<smem>>
    %67 = vector.broadcast %66 : f32 to vector<8x128xf32>
    %68 = arith.mulf %65, %67 : vector<8x128xf32>
    %69 = arith.addf %53, %68 : vector<8x128xf32>
    %c7 = arith.constant 7 : index
    %70 = memref.load %arg4[%c7] : memref<64xf32, #tpu.memory_space<smem>>
    %71 = vector.broadcast %70 : f32 to vector<8x128xf32>
    %72 = arith.mulf %65, %71 : vector<8x128xf32>
    %73 = arith.addf %57, %72 : vector<8x128xf32>
    %c4_17 = arith.constant 4 : index
    %74 = memref.load %arg2[%c4_17] : memref<32xf32, #tpu.memory_space<smem>>
    %75 = vector.broadcast %74 : f32 to vector<8x128xf32>
    %76 = arith.mulf %7, %75 : vector<8x128xf32>
    %c4_18 = arith.constant 4 : index
    %77 = memref.load %arg3[%c4_18] : memref<32xf32, #tpu.memory_space<smem>>
    %78 = vector.broadcast %77 : f32 to vector<8x128xf32>
    %79 = arith.addf %76, %78 : vector<8x128xf32>
    %cst_19 = arith.constant 0.000000e+00 : f32
    %80 = vector.broadcast %cst_19 : f32 to vector<8x128xf32>
    %81 = arith.maximumf %79, %80 : vector<8x128xf32>
    %c8 = arith.constant 8 : index
    %82 = memref.load %arg4[%c8] : memref<64xf32, #tpu.memory_space<smem>>
    %83 = vector.broadcast %82 : f32 to vector<8x128xf32>
    %84 = arith.mulf %81, %83 : vector<8x128xf32>
    %85 = arith.addf %69, %84 : vector<8x128xf32>
    %c9 = arith.constant 9 : index
    %86 = memref.load %arg4[%c9] : memref<64xf32, #tpu.memory_space<smem>>
    %87 = vector.broadcast %86 : f32 to vector<8x128xf32>
    %88 = arith.mulf %81, %87 : vector<8x128xf32>
    %89 = arith.addf %73, %88 : vector<8x128xf32>
    %c5_20 = arith.constant 5 : index
    %90 = memref.load %arg2[%c5_20] : memref<32xf32, #tpu.memory_space<smem>>
    %91 = vector.broadcast %90 : f32 to vector<8x128xf32>
    %92 = arith.mulf %7, %91 : vector<8x128xf32>
    %c5_21 = arith.constant 5 : index
    %93 = memref.load %arg3[%c5_21] : memref<32xf32, #tpu.memory_space<smem>>
    %94 = vector.broadcast %93 : f32 to vector<8x128xf32>
    %95 = arith.addf %92, %94 : vector<8x128xf32>
    %cst_22 = arith.constant 0.000000e+00 : f32
    %96 = vector.broadcast %cst_22 : f32 to vector<8x128xf32>
    %97 = arith.maximumf %95, %96 : vector<8x128xf32>
    %c10 = arith.constant 10 : index
    %98 = memref.load %arg4[%c10] : memref<64xf32, #tpu.memory_space<smem>>
    %99 = vector.broadcast %98 : f32 to vector<8x128xf32>
    %100 = arith.mulf %97, %99 : vector<8x128xf32>
    %101 = arith.addf %85, %100 : vector<8x128xf32>
    %c11 = arith.constant 11 : index
    %102 = memref.load %arg4[%c11] : memref<64xf32, #tpu.memory_space<smem>>
    %103 = vector.broadcast %102 : f32 to vector<8x128xf32>
    %104 = arith.mulf %97, %103 : vector<8x128xf32>
    %105 = arith.addf %89, %104 : vector<8x128xf32>
    %c6_23 = arith.constant 6 : index
    %106 = memref.load %arg2[%c6_23] : memref<32xf32, #tpu.memory_space<smem>>
    %107 = vector.broadcast %106 : f32 to vector<8x128xf32>
    %108 = arith.mulf %7, %107 : vector<8x128xf32>
    %c6_24 = arith.constant 6 : index
    %109 = memref.load %arg3[%c6_24] : memref<32xf32, #tpu.memory_space<smem>>
    %110 = vector.broadcast %109 : f32 to vector<8x128xf32>
    %111 = arith.addf %108, %110 : vector<8x128xf32>
    %cst_25 = arith.constant 0.000000e+00 : f32
    %112 = vector.broadcast %cst_25 : f32 to vector<8x128xf32>
    %113 = arith.maximumf %111, %112 : vector<8x128xf32>
    %c12 = arith.constant 12 : index
    %114 = memref.load %arg4[%c12] : memref<64xf32, #tpu.memory_space<smem>>
    %115 = vector.broadcast %114 : f32 to vector<8x128xf32>
    %116 = arith.mulf %113, %115 : vector<8x128xf32>
    %117 = arith.addf %101, %116 : vector<8x128xf32>
    %c13 = arith.constant 13 : index
    %118 = memref.load %arg4[%c13] : memref<64xf32, #tpu.memory_space<smem>>
    %119 = vector.broadcast %118 : f32 to vector<8x128xf32>
    %120 = arith.mulf %113, %119 : vector<8x128xf32>
    %121 = arith.addf %105, %120 : vector<8x128xf32>
    %c7_26 = arith.constant 7 : index
    %122 = memref.load %arg2[%c7_26] : memref<32xf32, #tpu.memory_space<smem>>
    %123 = vector.broadcast %122 : f32 to vector<8x128xf32>
    %124 = arith.mulf %7, %123 : vector<8x128xf32>
    %c7_27 = arith.constant 7 : index
    %125 = memref.load %arg3[%c7_27] : memref<32xf32, #tpu.memory_space<smem>>
    %126 = vector.broadcast %125 : f32 to vector<8x128xf32>
    %127 = arith.addf %124, %126 : vector<8x128xf32>
    %cst_28 = arith.constant 0.000000e+00 : f32
    %128 = vector.broadcast %cst_28 : f32 to vector<8x128xf32>
    %129 = arith.maximumf %127, %128 : vector<8x128xf32>
    %c14 = arith.constant 14 : index
    %130 = memref.load %arg4[%c14] : memref<64xf32, #tpu.memory_space<smem>>
    %131 = vector.broadcast %130 : f32 to vector<8x128xf32>
    %132 = arith.mulf %129, %131 : vector<8x128xf32>
    %133 = arith.addf %117, %132 : vector<8x128xf32>
    %c15 = arith.constant 15 : index
    %134 = memref.load %arg4[%c15] : memref<64xf32, #tpu.memory_space<smem>>
    %135 = vector.broadcast %134 : f32 to vector<8x128xf32>
    %136 = arith.mulf %129, %135 : vector<8x128xf32>
    %137 = arith.addf %121, %136 : vector<8x128xf32>
    %c8_29 = arith.constant 8 : index
    %138 = memref.load %arg2[%c8_29] : memref<32xf32, #tpu.memory_space<smem>>
    %139 = vector.broadcast %138 : f32 to vector<8x128xf32>
    %140 = arith.mulf %7, %139 : vector<8x128xf32>
    %c8_30 = arith.constant 8 : index
    %141 = memref.load %arg3[%c8_30] : memref<32xf32, #tpu.memory_space<smem>>
    %142 = vector.broadcast %141 : f32 to vector<8x128xf32>
    %143 = arith.addf %140, %142 : vector<8x128xf32>
    %cst_31 = arith.constant 0.000000e+00 : f32
    %144 = vector.broadcast %cst_31 : f32 to vector<8x128xf32>
    %145 = arith.maximumf %143, %144 : vector<8x128xf32>
    %c16 = arith.constant 16 : index
    %146 = memref.load %arg4[%c16] : memref<64xf32, #tpu.memory_space<smem>>
    %147 = vector.broadcast %146 : f32 to vector<8x128xf32>
    %148 = arith.mulf %145, %147 : vector<8x128xf32>
    %149 = arith.addf %133, %148 : vector<8x128xf32>
    %c17 = arith.constant 17 : index
    %150 = memref.load %arg4[%c17] : memref<64xf32, #tpu.memory_space<smem>>
    %151 = vector.broadcast %150 : f32 to vector<8x128xf32>
    %152 = arith.mulf %145, %151 : vector<8x128xf32>
    %153 = arith.addf %137, %152 : vector<8x128xf32>
    %c9_32 = arith.constant 9 : index
    %154 = memref.load %arg2[%c9_32] : memref<32xf32, #tpu.memory_space<smem>>
    %155 = vector.broadcast %154 : f32 to vector<8x128xf32>
    %156 = arith.mulf %7, %155 : vector<8x128xf32>
    %c9_33 = arith.constant 9 : index
    %157 = memref.load %arg3[%c9_33] : memref<32xf32, #tpu.memory_space<smem>>
    %158 = vector.broadcast %157 : f32 to vector<8x128xf32>
    %159 = arith.addf %156, %158 : vector<8x128xf32>
    %cst_34 = arith.constant 0.000000e+00 : f32
    %160 = vector.broadcast %cst_34 : f32 to vector<8x128xf32>
    %161 = arith.maximumf %159, %160 : vector<8x128xf32>
    %c18 = arith.constant 18 : index
    %162 = memref.load %arg4[%c18] : memref<64xf32, #tpu.memory_space<smem>>
    %163 = vector.broadcast %162 : f32 to vector<8x128xf32>
    %164 = arith.mulf %161, %163 : vector<8x128xf32>
    %165 = arith.addf %149, %164 : vector<8x128xf32>
    %c19 = arith.constant 19 : index
    %166 = memref.load %arg4[%c19] : memref<64xf32, #tpu.memory_space<smem>>
    %167 = vector.broadcast %166 : f32 to vector<8x128xf32>
    %168 = arith.mulf %161, %167 : vector<8x128xf32>
    %169 = arith.addf %153, %168 : vector<8x128xf32>
    %c10_35 = arith.constant 10 : index
    %170 = memref.load %arg2[%c10_35] : memref<32xf32, #tpu.memory_space<smem>>
    %171 = vector.broadcast %170 : f32 to vector<8x128xf32>
    %172 = arith.mulf %7, %171 : vector<8x128xf32>
    %c10_36 = arith.constant 10 : index
    %173 = memref.load %arg3[%c10_36] : memref<32xf32, #tpu.memory_space<smem>>
    %174 = vector.broadcast %173 : f32 to vector<8x128xf32>
    %175 = arith.addf %172, %174 : vector<8x128xf32>
    %cst_37 = arith.constant 0.000000e+00 : f32
    %176 = vector.broadcast %cst_37 : f32 to vector<8x128xf32>
    %177 = arith.maximumf %175, %176 : vector<8x128xf32>
    %c20 = arith.constant 20 : index
    %178 = memref.load %arg4[%c20] : memref<64xf32, #tpu.memory_space<smem>>
    %179 = vector.broadcast %178 : f32 to vector<8x128xf32>
    %180 = arith.mulf %177, %179 : vector<8x128xf32>
    %181 = arith.addf %165, %180 : vector<8x128xf32>
    %c21 = arith.constant 21 : index
    %182 = memref.load %arg4[%c21] : memref<64xf32, #tpu.memory_space<smem>>
    %183 = vector.broadcast %182 : f32 to vector<8x128xf32>
    %184 = arith.mulf %177, %183 : vector<8x128xf32>
    %185 = arith.addf %169, %184 : vector<8x128xf32>
    %c11_38 = arith.constant 11 : index
    %186 = memref.load %arg2[%c11_38] : memref<32xf32, #tpu.memory_space<smem>>
    %187 = vector.broadcast %186 : f32 to vector<8x128xf32>
    %188 = arith.mulf %7, %187 : vector<8x128xf32>
    %c11_39 = arith.constant 11 : index
    %189 = memref.load %arg3[%c11_39] : memref<32xf32, #tpu.memory_space<smem>>
    %190 = vector.broadcast %189 : f32 to vector<8x128xf32>
    %191 = arith.addf %188, %190 : vector<8x128xf32>
    %cst_40 = arith.constant 0.000000e+00 : f32
    %192 = vector.broadcast %cst_40 : f32 to vector<8x128xf32>
    %193 = arith.maximumf %191, %192 : vector<8x128xf32>
    %c22 = arith.constant 22 : index
    %194 = memref.load %arg4[%c22] : memref<64xf32, #tpu.memory_space<smem>>
    %195 = vector.broadcast %194 : f32 to vector<8x128xf32>
    %196 = arith.mulf %193, %195 : vector<8x128xf32>
    %197 = arith.addf %181, %196 : vector<8x128xf32>
    %c23 = arith.constant 23 : index
    %198 = memref.load %arg4[%c23] : memref<64xf32, #tpu.memory_space<smem>>
    %199 = vector.broadcast %198 : f32 to vector<8x128xf32>
    %200 = arith.mulf %193, %199 : vector<8x128xf32>
    %201 = arith.addf %185, %200 : vector<8x128xf32>
    %c12_41 = arith.constant 12 : index
    %202 = memref.load %arg2[%c12_41] : memref<32xf32, #tpu.memory_space<smem>>
    %203 = vector.broadcast %202 : f32 to vector<8x128xf32>
    %204 = arith.mulf %7, %203 : vector<8x128xf32>
    %c12_42 = arith.constant 12 : index
    %205 = memref.load %arg3[%c12_42] : memref<32xf32, #tpu.memory_space<smem>>
    %206 = vector.broadcast %205 : f32 to vector<8x128xf32>
    %207 = arith.addf %204, %206 : vector<8x128xf32>
    %cst_43 = arith.constant 0.000000e+00 : f32
    %208 = vector.broadcast %cst_43 : f32 to vector<8x128xf32>
    %209 = arith.maximumf %207, %208 : vector<8x128xf32>
    %c24 = arith.constant 24 : index
    %210 = memref.load %arg4[%c24] : memref<64xf32, #tpu.memory_space<smem>>
    %211 = vector.broadcast %210 : f32 to vector<8x128xf32>
    %212 = arith.mulf %209, %211 : vector<8x128xf32>
    %213 = arith.addf %197, %212 : vector<8x128xf32>
    %c25 = arith.constant 25 : index
    %214 = memref.load %arg4[%c25] : memref<64xf32, #tpu.memory_space<smem>>
    %215 = vector.broadcast %214 : f32 to vector<8x128xf32>
    %216 = arith.mulf %209, %215 : vector<8x128xf32>
    %217 = arith.addf %201, %216 : vector<8x128xf32>
    %c13_44 = arith.constant 13 : index
    %218 = memref.load %arg2[%c13_44] : memref<32xf32, #tpu.memory_space<smem>>
    %219 = vector.broadcast %218 : f32 to vector<8x128xf32>
    %220 = arith.mulf %7, %219 : vector<8x128xf32>
    %c13_45 = arith.constant 13 : index
    %221 = memref.load %arg3[%c13_45] : memref<32xf32, #tpu.memory_space<smem>>
    %222 = vector.broadcast %221 : f32 to vector<8x128xf32>
    %223 = arith.addf %220, %222 : vector<8x128xf32>
    %cst_46 = arith.constant 0.000000e+00 : f32
    %224 = vector.broadcast %cst_46 : f32 to vector<8x128xf32>
    %225 = arith.maximumf %223, %224 : vector<8x128xf32>
    %c26 = arith.constant 26 : index
    %226 = memref.load %arg4[%c26] : memref<64xf32, #tpu.memory_space<smem>>
    %227 = vector.broadcast %226 : f32 to vector<8x128xf32>
    %228 = arith.mulf %225, %227 : vector<8x128xf32>
    %229 = arith.addf %213, %228 : vector<8x128xf32>
    %c27 = arith.constant 27 : index
    %230 = memref.load %arg4[%c27] : memref<64xf32, #tpu.memory_space<smem>>
    %231 = vector.broadcast %230 : f32 to vector<8x128xf32>
    %232 = arith.mulf %225, %231 : vector<8x128xf32>
    %233 = arith.addf %217, %232 : vector<8x128xf32>
    %c14_47 = arith.constant 14 : index
    %234 = memref.load %arg2[%c14_47] : memref<32xf32, #tpu.memory_space<smem>>
    %235 = vector.broadcast %234 : f32 to vector<8x128xf32>
    %236 = arith.mulf %7, %235 : vector<8x128xf32>
    %c14_48 = arith.constant 14 : index
    %237 = memref.load %arg3[%c14_48] : memref<32xf32, #tpu.memory_space<smem>>
    %238 = vector.broadcast %237 : f32 to vector<8x128xf32>
    %239 = arith.addf %236, %238 : vector<8x128xf32>
    %cst_49 = arith.constant 0.000000e+00 : f32
    %240 = vector.broadcast %cst_49 : f32 to vector<8x128xf32>
    %241 = arith.maximumf %239, %240 : vector<8x128xf32>
    %c28 = arith.constant 28 : index
    %242 = memref.load %arg4[%c28] : memref<64xf32, #tpu.memory_space<smem>>
    %243 = vector.broadcast %242 : f32 to vector<8x128xf32>
    %244 = arith.mulf %241, %243 : vector<8x128xf32>
    %245 = arith.addf %229, %244 : vector<8x128xf32>
    %c29 = arith.constant 29 : index
    %246 = memref.load %arg4[%c29] : memref<64xf32, #tpu.memory_space<smem>>
    %247 = vector.broadcast %246 : f32 to vector<8x128xf32>
    %248 = arith.mulf %241, %247 : vector<8x128xf32>
    %249 = arith.addf %233, %248 : vector<8x128xf32>
    %c15_50 = arith.constant 15 : index
    %250 = memref.load %arg2[%c15_50] : memref<32xf32, #tpu.memory_space<smem>>
    %251 = vector.broadcast %250 : f32 to vector<8x128xf32>
    %252 = arith.mulf %7, %251 : vector<8x128xf32>
    %c15_51 = arith.constant 15 : index
    %253 = memref.load %arg3[%c15_51] : memref<32xf32, #tpu.memory_space<smem>>
    %254 = vector.broadcast %253 : f32 to vector<8x128xf32>
    %255 = arith.addf %252, %254 : vector<8x128xf32>
    %cst_52 = arith.constant 0.000000e+00 : f32
    %256 = vector.broadcast %cst_52 : f32 to vector<8x128xf32>
    %257 = arith.maximumf %255, %256 : vector<8x128xf32>
    %c30 = arith.constant 30 : index
    %258 = memref.load %arg4[%c30] : memref<64xf32, #tpu.memory_space<smem>>
    %259 = vector.broadcast %258 : f32 to vector<8x128xf32>
    %260 = arith.mulf %257, %259 : vector<8x128xf32>
    %261 = arith.addf %245, %260 : vector<8x128xf32>
    %c31 = arith.constant 31 : index
    %262 = memref.load %arg4[%c31] : memref<64xf32, #tpu.memory_space<smem>>
    %263 = vector.broadcast %262 : f32 to vector<8x128xf32>
    %264 = arith.mulf %257, %263 : vector<8x128xf32>
    %265 = arith.addf %249, %264 : vector<8x128xf32>
    %c16_53 = arith.constant 16 : index
    %266 = memref.load %arg2[%c16_53] : memref<32xf32, #tpu.memory_space<smem>>
    %267 = vector.broadcast %266 : f32 to vector<8x128xf32>
    %268 = arith.mulf %7, %267 : vector<8x128xf32>
    %c16_54 = arith.constant 16 : index
    %269 = memref.load %arg3[%c16_54] : memref<32xf32, #tpu.memory_space<smem>>
    %270 = vector.broadcast %269 : f32 to vector<8x128xf32>
    %271 = arith.addf %268, %270 : vector<8x128xf32>
    %cst_55 = arith.constant 0.000000e+00 : f32
    %272 = vector.broadcast %cst_55 : f32 to vector<8x128xf32>
    %273 = arith.maximumf %271, %272 : vector<8x128xf32>
    %c32 = arith.constant 32 : index
    %274 = memref.load %arg4[%c32] : memref<64xf32, #tpu.memory_space<smem>>
    %275 = vector.broadcast %274 : f32 to vector<8x128xf32>
    %276 = arith.mulf %273, %275 : vector<8x128xf32>
    %277 = arith.addf %261, %276 : vector<8x128xf32>
    %c33 = arith.constant 33 : index
    %278 = memref.load %arg4[%c33] : memref<64xf32, #tpu.memory_space<smem>>
    %279 = vector.broadcast %278 : f32 to vector<8x128xf32>
    %280 = arith.mulf %273, %279 : vector<8x128xf32>
    %281 = arith.addf %265, %280 : vector<8x128xf32>
    %c17_56 = arith.constant 17 : index
    %282 = memref.load %arg2[%c17_56] : memref<32xf32, #tpu.memory_space<smem>>
    %283 = vector.broadcast %282 : f32 to vector<8x128xf32>
    %284 = arith.mulf %7, %283 : vector<8x128xf32>
    %c17_57 = arith.constant 17 : index
    %285 = memref.load %arg3[%c17_57] : memref<32xf32, #tpu.memory_space<smem>>
    %286 = vector.broadcast %285 : f32 to vector<8x128xf32>
    %287 = arith.addf %284, %286 : vector<8x128xf32>
    %cst_58 = arith.constant 0.000000e+00 : f32
    %288 = vector.broadcast %cst_58 : f32 to vector<8x128xf32>
    %289 = arith.maximumf %287, %288 : vector<8x128xf32>
    %c34 = arith.constant 34 : index
    %290 = memref.load %arg4[%c34] : memref<64xf32, #tpu.memory_space<smem>>
    %291 = vector.broadcast %290 : f32 to vector<8x128xf32>
    %292 = arith.mulf %289, %291 : vector<8x128xf32>
    %293 = arith.addf %277, %292 : vector<8x128xf32>
    %c35 = arith.constant 35 : index
    %294 = memref.load %arg4[%c35] : memref<64xf32, #tpu.memory_space<smem>>
    %295 = vector.broadcast %294 : f32 to vector<8x128xf32>
    %296 = arith.mulf %289, %295 : vector<8x128xf32>
    %297 = arith.addf %281, %296 : vector<8x128xf32>
    %c18_59 = arith.constant 18 : index
    %298 = memref.load %arg2[%c18_59] : memref<32xf32, #tpu.memory_space<smem>>
    %299 = vector.broadcast %298 : f32 to vector<8x128xf32>
    %300 = arith.mulf %7, %299 : vector<8x128xf32>
    %c18_60 = arith.constant 18 : index
    %301 = memref.load %arg3[%c18_60] : memref<32xf32, #tpu.memory_space<smem>>
    %302 = vector.broadcast %301 : f32 to vector<8x128xf32>
    %303 = arith.addf %300, %302 : vector<8x128xf32>
    %cst_61 = arith.constant 0.000000e+00 : f32
    %304 = vector.broadcast %cst_61 : f32 to vector<8x128xf32>
    %305 = arith.maximumf %303, %304 : vector<8x128xf32>
    %c36 = arith.constant 36 : index
    %306 = memref.load %arg4[%c36] : memref<64xf32, #tpu.memory_space<smem>>
    %307 = vector.broadcast %306 : f32 to vector<8x128xf32>
    %308 = arith.mulf %305, %307 : vector<8x128xf32>
    %309 = arith.addf %293, %308 : vector<8x128xf32>
    %c37 = arith.constant 37 : index
    %310 = memref.load %arg4[%c37] : memref<64xf32, #tpu.memory_space<smem>>
    %311 = vector.broadcast %310 : f32 to vector<8x128xf32>
    %312 = arith.mulf %305, %311 : vector<8x128xf32>
    %313 = arith.addf %297, %312 : vector<8x128xf32>
    %c19_62 = arith.constant 19 : index
    %314 = memref.load %arg2[%c19_62] : memref<32xf32, #tpu.memory_space<smem>>
    %315 = vector.broadcast %314 : f32 to vector<8x128xf32>
    %316 = arith.mulf %7, %315 : vector<8x128xf32>
    %c19_63 = arith.constant 19 : index
    %317 = memref.load %arg3[%c19_63] : memref<32xf32, #tpu.memory_space<smem>>
    %318 = vector.broadcast %317 : f32 to vector<8x128xf32>
    %319 = arith.addf %316, %318 : vector<8x128xf32>
    %cst_64 = arith.constant 0.000000e+00 : f32
    %320 = vector.broadcast %cst_64 : f32 to vector<8x128xf32>
    %321 = arith.maximumf %319, %320 : vector<8x128xf32>
    %c38 = arith.constant 38 : index
    %322 = memref.load %arg4[%c38] : memref<64xf32, #tpu.memory_space<smem>>
    %323 = vector.broadcast %322 : f32 to vector<8x128xf32>
    %324 = arith.mulf %321, %323 : vector<8x128xf32>
    %325 = arith.addf %309, %324 : vector<8x128xf32>
    %c39 = arith.constant 39 : index
    %326 = memref.load %arg4[%c39] : memref<64xf32, #tpu.memory_space<smem>>
    %327 = vector.broadcast %326 : f32 to vector<8x128xf32>
    %328 = arith.mulf %321, %327 : vector<8x128xf32>
    %329 = arith.addf %313, %328 : vector<8x128xf32>
    %c20_65 = arith.constant 20 : index
    %330 = memref.load %arg2[%c20_65] : memref<32xf32, #tpu.memory_space<smem>>
    %331 = vector.broadcast %330 : f32 to vector<8x128xf32>
    %332 = arith.mulf %7, %331 : vector<8x128xf32>
    %c20_66 = arith.constant 20 : index
    %333 = memref.load %arg3[%c20_66] : memref<32xf32, #tpu.memory_space<smem>>
    %334 = vector.broadcast %333 : f32 to vector<8x128xf32>
    %335 = arith.addf %332, %334 : vector<8x128xf32>
    %cst_67 = arith.constant 0.000000e+00 : f32
    %336 = vector.broadcast %cst_67 : f32 to vector<8x128xf32>
    %337 = arith.maximumf %335, %336 : vector<8x128xf32>
    %c40 = arith.constant 40 : index
    %338 = memref.load %arg4[%c40] : memref<64xf32, #tpu.memory_space<smem>>
    %339 = vector.broadcast %338 : f32 to vector<8x128xf32>
    %340 = arith.mulf %337, %339 : vector<8x128xf32>
    %341 = arith.addf %325, %340 : vector<8x128xf32>
    %c41 = arith.constant 41 : index
    %342 = memref.load %arg4[%c41] : memref<64xf32, #tpu.memory_space<smem>>
    %343 = vector.broadcast %342 : f32 to vector<8x128xf32>
    %344 = arith.mulf %337, %343 : vector<8x128xf32>
    %345 = arith.addf %329, %344 : vector<8x128xf32>
    %c21_68 = arith.constant 21 : index
    %346 = memref.load %arg2[%c21_68] : memref<32xf32, #tpu.memory_space<smem>>
    %347 = vector.broadcast %346 : f32 to vector<8x128xf32>
    %348 = arith.mulf %7, %347 : vector<8x128xf32>
    %c21_69 = arith.constant 21 : index
    %349 = memref.load %arg3[%c21_69] : memref<32xf32, #tpu.memory_space<smem>>
    %350 = vector.broadcast %349 : f32 to vector<8x128xf32>
    %351 = arith.addf %348, %350 : vector<8x128xf32>
    %cst_70 = arith.constant 0.000000e+00 : f32
    %352 = vector.broadcast %cst_70 : f32 to vector<8x128xf32>
    %353 = arith.maximumf %351, %352 : vector<8x128xf32>
    %c42 = arith.constant 42 : index
    %354 = memref.load %arg4[%c42] : memref<64xf32, #tpu.memory_space<smem>>
    %355 = vector.broadcast %354 : f32 to vector<8x128xf32>
    %356 = arith.mulf %353, %355 : vector<8x128xf32>
    %357 = arith.addf %341, %356 : vector<8x128xf32>
    %c43 = arith.constant 43 : index
    %358 = memref.load %arg4[%c43] : memref<64xf32, #tpu.memory_space<smem>>
    %359 = vector.broadcast %358 : f32 to vector<8x128xf32>
    %360 = arith.mulf %353, %359 : vector<8x128xf32>
    %361 = arith.addf %345, %360 : vector<8x128xf32>
    %c22_71 = arith.constant 22 : index
    %362 = memref.load %arg2[%c22_71] : memref<32xf32, #tpu.memory_space<smem>>
    %363 = vector.broadcast %362 : f32 to vector<8x128xf32>
    %364 = arith.mulf %7, %363 : vector<8x128xf32>
    %c22_72 = arith.constant 22 : index
    %365 = memref.load %arg3[%c22_72] : memref<32xf32, #tpu.memory_space<smem>>
    %366 = vector.broadcast %365 : f32 to vector<8x128xf32>
    %367 = arith.addf %364, %366 : vector<8x128xf32>
    %cst_73 = arith.constant 0.000000e+00 : f32
    %368 = vector.broadcast %cst_73 : f32 to vector<8x128xf32>
    %369 = arith.maximumf %367, %368 : vector<8x128xf32>
    %c44 = arith.constant 44 : index
    %370 = memref.load %arg4[%c44] : memref<64xf32, #tpu.memory_space<smem>>
    %371 = vector.broadcast %370 : f32 to vector<8x128xf32>
    %372 = arith.mulf %369, %371 : vector<8x128xf32>
    %373 = arith.addf %357, %372 : vector<8x128xf32>
    %c45 = arith.constant 45 : index
    %374 = memref.load %arg4[%c45] : memref<64xf32, #tpu.memory_space<smem>>
    %375 = vector.broadcast %374 : f32 to vector<8x128xf32>
    %376 = arith.mulf %369, %375 : vector<8x128xf32>
    %377 = arith.addf %361, %376 : vector<8x128xf32>
    %c23_74 = arith.constant 23 : index
    %378 = memref.load %arg2[%c23_74] : memref<32xf32, #tpu.memory_space<smem>>
    %379 = vector.broadcast %378 : f32 to vector<8x128xf32>
    %380 = arith.mulf %7, %379 : vector<8x128xf32>
    %c23_75 = arith.constant 23 : index
    %381 = memref.load %arg3[%c23_75] : memref<32xf32, #tpu.memory_space<smem>>
    %382 = vector.broadcast %381 : f32 to vector<8x128xf32>
    %383 = arith.addf %380, %382 : vector<8x128xf32>
    %cst_76 = arith.constant 0.000000e+00 : f32
    %384 = vector.broadcast %cst_76 : f32 to vector<8x128xf32>
    %385 = arith.maximumf %383, %384 : vector<8x128xf32>
    %c46 = arith.constant 46 : index
    %386 = memref.load %arg4[%c46] : memref<64xf32, #tpu.memory_space<smem>>
    %387 = vector.broadcast %386 : f32 to vector<8x128xf32>
    %388 = arith.mulf %385, %387 : vector<8x128xf32>
    %389 = arith.addf %373, %388 : vector<8x128xf32>
    %c47 = arith.constant 47 : index
    %390 = memref.load %arg4[%c47] : memref<64xf32, #tpu.memory_space<smem>>
    %391 = vector.broadcast %390 : f32 to vector<8x128xf32>
    %392 = arith.mulf %385, %391 : vector<8x128xf32>
    %393 = arith.addf %377, %392 : vector<8x128xf32>
    %c24_77 = arith.constant 24 : index
    %394 = memref.load %arg2[%c24_77] : memref<32xf32, #tpu.memory_space<smem>>
    %395 = vector.broadcast %394 : f32 to vector<8x128xf32>
    %396 = arith.mulf %7, %395 : vector<8x128xf32>
    %c24_78 = arith.constant 24 : index
    %397 = memref.load %arg3[%c24_78] : memref<32xf32, #tpu.memory_space<smem>>
    %398 = vector.broadcast %397 : f32 to vector<8x128xf32>
    %399 = arith.addf %396, %398 : vector<8x128xf32>
    %cst_79 = arith.constant 0.000000e+00 : f32
    %400 = vector.broadcast %cst_79 : f32 to vector<8x128xf32>
    %401 = arith.maximumf %399, %400 : vector<8x128xf32>
    %c48 = arith.constant 48 : index
    %402 = memref.load %arg4[%c48] : memref<64xf32, #tpu.memory_space<smem>>
    %403 = vector.broadcast %402 : f32 to vector<8x128xf32>
    %404 = arith.mulf %401, %403 : vector<8x128xf32>
    %405 = arith.addf %389, %404 : vector<8x128xf32>
    %c49 = arith.constant 49 : index
    %406 = memref.load %arg4[%c49] : memref<64xf32, #tpu.memory_space<smem>>
    %407 = vector.broadcast %406 : f32 to vector<8x128xf32>
    %408 = arith.mulf %401, %407 : vector<8x128xf32>
    %409 = arith.addf %393, %408 : vector<8x128xf32>
    %c25_80 = arith.constant 25 : index
    %410 = memref.load %arg2[%c25_80] : memref<32xf32, #tpu.memory_space<smem>>
    %411 = vector.broadcast %410 : f32 to vector<8x128xf32>
    %412 = arith.mulf %7, %411 : vector<8x128xf32>
    %c25_81 = arith.constant 25 : index
    %413 = memref.load %arg3[%c25_81] : memref<32xf32, #tpu.memory_space<smem>>
    %414 = vector.broadcast %413 : f32 to vector<8x128xf32>
    %415 = arith.addf %412, %414 : vector<8x128xf32>
    %cst_82 = arith.constant 0.000000e+00 : f32
    %416 = vector.broadcast %cst_82 : f32 to vector<8x128xf32>
    %417 = arith.maximumf %415, %416 : vector<8x128xf32>
    %c50 = arith.constant 50 : index
    %418 = memref.load %arg4[%c50] : memref<64xf32, #tpu.memory_space<smem>>
    %419 = vector.broadcast %418 : f32 to vector<8x128xf32>
    %420 = arith.mulf %417, %419 : vector<8x128xf32>
    %421 = arith.addf %405, %420 : vector<8x128xf32>
    %c51 = arith.constant 51 : index
    %422 = memref.load %arg4[%c51] : memref<64xf32, #tpu.memory_space<smem>>
    %423 = vector.broadcast %422 : f32 to vector<8x128xf32>
    %424 = arith.mulf %417, %423 : vector<8x128xf32>
    %425 = arith.addf %409, %424 : vector<8x128xf32>
    %c26_83 = arith.constant 26 : index
    %426 = memref.load %arg2[%c26_83] : memref<32xf32, #tpu.memory_space<smem>>
    %427 = vector.broadcast %426 : f32 to vector<8x128xf32>
    %428 = arith.mulf %7, %427 : vector<8x128xf32>
    %c26_84 = arith.constant 26 : index
    %429 = memref.load %arg3[%c26_84] : memref<32xf32, #tpu.memory_space<smem>>
    %430 = vector.broadcast %429 : f32 to vector<8x128xf32>
    %431 = arith.addf %428, %430 : vector<8x128xf32>
    %cst_85 = arith.constant 0.000000e+00 : f32
    %432 = vector.broadcast %cst_85 : f32 to vector<8x128xf32>
    %433 = arith.maximumf %431, %432 : vector<8x128xf32>
    %c52 = arith.constant 52 : index
    %434 = memref.load %arg4[%c52] : memref<64xf32, #tpu.memory_space<smem>>
    %435 = vector.broadcast %434 : f32 to vector<8x128xf32>
    %436 = arith.mulf %433, %435 : vector<8x128xf32>
    %437 = arith.addf %421, %436 : vector<8x128xf32>
    %c53 = arith.constant 53 : index
    %438 = memref.load %arg4[%c53] : memref<64xf32, #tpu.memory_space<smem>>
    %439 = vector.broadcast %438 : f32 to vector<8x128xf32>
    %440 = arith.mulf %433, %439 : vector<8x128xf32>
    %441 = arith.addf %425, %440 : vector<8x128xf32>
    %c27_86 = arith.constant 27 : index
    %442 = memref.load %arg2[%c27_86] : memref<32xf32, #tpu.memory_space<smem>>
    %443 = vector.broadcast %442 : f32 to vector<8x128xf32>
    %444 = arith.mulf %7, %443 : vector<8x128xf32>
    %c27_87 = arith.constant 27 : index
    %445 = memref.load %arg3[%c27_87] : memref<32xf32, #tpu.memory_space<smem>>
    %446 = vector.broadcast %445 : f32 to vector<8x128xf32>
    %447 = arith.addf %444, %446 : vector<8x128xf32>
    %cst_88 = arith.constant 0.000000e+00 : f32
    %448 = vector.broadcast %cst_88 : f32 to vector<8x128xf32>
    %449 = arith.maximumf %447, %448 : vector<8x128xf32>
    %c54 = arith.constant 54 : index
    %450 = memref.load %arg4[%c54] : memref<64xf32, #tpu.memory_space<smem>>
    %451 = vector.broadcast %450 : f32 to vector<8x128xf32>
    %452 = arith.mulf %449, %451 : vector<8x128xf32>
    %453 = arith.addf %437, %452 : vector<8x128xf32>
    %c55 = arith.constant 55 : index
    %454 = memref.load %arg4[%c55] : memref<64xf32, #tpu.memory_space<smem>>
    %455 = vector.broadcast %454 : f32 to vector<8x128xf32>
    %456 = arith.mulf %449, %455 : vector<8x128xf32>
    %457 = arith.addf %441, %456 : vector<8x128xf32>
    %c28_89 = arith.constant 28 : index
    %458 = memref.load %arg2[%c28_89] : memref<32xf32, #tpu.memory_space<smem>>
    %459 = vector.broadcast %458 : f32 to vector<8x128xf32>
    %460 = arith.mulf %7, %459 : vector<8x128xf32>
    %c28_90 = arith.constant 28 : index
    %461 = memref.load %arg3[%c28_90] : memref<32xf32, #tpu.memory_space<smem>>
    %462 = vector.broadcast %461 : f32 to vector<8x128xf32>
    %463 = arith.addf %460, %462 : vector<8x128xf32>
    %cst_91 = arith.constant 0.000000e+00 : f32
    %464 = vector.broadcast %cst_91 : f32 to vector<8x128xf32>
    %465 = arith.maximumf %463, %464 : vector<8x128xf32>
    %c56 = arith.constant 56 : index
    %466 = memref.load %arg4[%c56] : memref<64xf32, #tpu.memory_space<smem>>
    %467 = vector.broadcast %466 : f32 to vector<8x128xf32>
    %468 = arith.mulf %465, %467 : vector<8x128xf32>
    %469 = arith.addf %453, %468 : vector<8x128xf32>
    %c57 = arith.constant 57 : index
    %470 = memref.load %arg4[%c57] : memref<64xf32, #tpu.memory_space<smem>>
    %471 = vector.broadcast %470 : f32 to vector<8x128xf32>
    %472 = arith.mulf %465, %471 : vector<8x128xf32>
    %473 = arith.addf %457, %472 : vector<8x128xf32>
    %c29_92 = arith.constant 29 : index
    %474 = memref.load %arg2[%c29_92] : memref<32xf32, #tpu.memory_space<smem>>
    %475 = vector.broadcast %474 : f32 to vector<8x128xf32>
    %476 = arith.mulf %7, %475 : vector<8x128xf32>
    %c29_93 = arith.constant 29 : index
    %477 = memref.load %arg3[%c29_93] : memref<32xf32, #tpu.memory_space<smem>>
    %478 = vector.broadcast %477 : f32 to vector<8x128xf32>
    %479 = arith.addf %476, %478 : vector<8x128xf32>
    %cst_94 = arith.constant 0.000000e+00 : f32
    %480 = vector.broadcast %cst_94 : f32 to vector<8x128xf32>
    %481 = arith.maximumf %479, %480 : vector<8x128xf32>
    %c58 = arith.constant 58 : index
    %482 = memref.load %arg4[%c58] : memref<64xf32, #tpu.memory_space<smem>>
    %483 = vector.broadcast %482 : f32 to vector<8x128xf32>
    %484 = arith.mulf %481, %483 : vector<8x128xf32>
    %485 = arith.addf %469, %484 : vector<8x128xf32>
    %c59 = arith.constant 59 : index
    %486 = memref.load %arg4[%c59] : memref<64xf32, #tpu.memory_space<smem>>
    %487 = vector.broadcast %486 : f32 to vector<8x128xf32>
    %488 = arith.mulf %481, %487 : vector<8x128xf32>
    %489 = arith.addf %473, %488 : vector<8x128xf32>
    %c30_95 = arith.constant 30 : index
    %490 = memref.load %arg2[%c30_95] : memref<32xf32, #tpu.memory_space<smem>>
    %491 = vector.broadcast %490 : f32 to vector<8x128xf32>
    %492 = arith.mulf %7, %491 : vector<8x128xf32>
    %c30_96 = arith.constant 30 : index
    %493 = memref.load %arg3[%c30_96] : memref<32xf32, #tpu.memory_space<smem>>
    %494 = vector.broadcast %493 : f32 to vector<8x128xf32>
    %495 = arith.addf %492, %494 : vector<8x128xf32>
    %cst_97 = arith.constant 0.000000e+00 : f32
    %496 = vector.broadcast %cst_97 : f32 to vector<8x128xf32>
    %497 = arith.maximumf %495, %496 : vector<8x128xf32>
    %c60 = arith.constant 60 : index
    %498 = memref.load %arg4[%c60] : memref<64xf32, #tpu.memory_space<smem>>
    %499 = vector.broadcast %498 : f32 to vector<8x128xf32>
    %500 = arith.mulf %497, %499 : vector<8x128xf32>
    %501 = arith.addf %485, %500 : vector<8x128xf32>
    %c61 = arith.constant 61 : index
    %502 = memref.load %arg4[%c61] : memref<64xf32, #tpu.memory_space<smem>>
    %503 = vector.broadcast %502 : f32 to vector<8x128xf32>
    %504 = arith.mulf %497, %503 : vector<8x128xf32>
    %505 = arith.addf %489, %504 : vector<8x128xf32>
    %c31_98 = arith.constant 31 : index
    %506 = memref.load %arg2[%c31_98] : memref<32xf32, #tpu.memory_space<smem>>
    %507 = vector.broadcast %506 : f32 to vector<8x128xf32>
    %508 = arith.mulf %7, %507 : vector<8x128xf32>
    %c31_99 = arith.constant 31 : index
    %509 = memref.load %arg3[%c31_99] : memref<32xf32, #tpu.memory_space<smem>>
    %510 = vector.broadcast %509 : f32 to vector<8x128xf32>
    %511 = arith.addf %508, %510 : vector<8x128xf32>
    %cst_100 = arith.constant 0.000000e+00 : f32
    %512 = vector.broadcast %cst_100 : f32 to vector<8x128xf32>
    %513 = arith.maximumf %511, %512 : vector<8x128xf32>
    %c62 = arith.constant 62 : index
    %514 = memref.load %arg4[%c62] : memref<64xf32, #tpu.memory_space<smem>>
    %515 = vector.broadcast %514 : f32 to vector<8x128xf32>
    %516 = arith.mulf %513, %515 : vector<8x128xf32>
    %517 = arith.addf %501, %516 : vector<8x128xf32>
    %c63 = arith.constant 63 : index
    %518 = memref.load %arg4[%c63] : memref<64xf32, #tpu.memory_space<smem>>
    %519 = vector.broadcast %518 : f32 to vector<8x128xf32>
    %520 = arith.mulf %513, %519 : vector<8x128xf32>
    %521 = arith.addf %505, %520 : vector<8x128xf32>
    %522 = vector.broadcast %0 : f32 to vector<8x128xf32>
    %523 = arith.addf %517, %522 : vector<8x128xf32>
    %c0_101 = arith.constant 0 : index
    %524 = arith.index_cast %5 : i32 to index
    %c0_102 = arith.constant 0 : index
    %525 = vector.load %arg6[%c0_101, %524, %c0_102] : memref<2x8x128xf32, #tpu.memory_space<vmem>>, vector<1x8x128xf32>
    %526 = vector.shape_cast %525 : vector<1x8x128xf32> to vector<8x128xf32>
    %527 = vector.shape_cast %523 : vector<8x128xf32> to vector<1x8x128xf32>
    tpu.vector_store %arg6[%c0_101, %524, %c0_102], %527 {strides = array<i32>} : memref<2x8x128xf32, #tpu.memory_space<vmem>>, vector<1x8x128xf32>,
    %528 = vector.broadcast %1 : f32 to vector<8x128xf32>
    %529 = arith.addf %521, %528 : vector<8x128xf32>
    %c1_103 = arith.constant 1 : index
    %530 = arith.index_cast %5 : i32 to index
    %c0_104 = arith.constant 0 : index
    %531 = vector.load %arg6[%c1_103, %530, %c0_104] : memref<2x8x128xf32, #tpu.memory_space<vmem>>, vector<1x8x128xf32>
    %532 = vector.shape_cast %531 : vector<1x8x128xf32> to vector<8x128xf32>
    %533 = vector.shape_cast %529 : vector<8x128xf32> to vector<1x8x128xf32>
    tpu.vector_store %arg6[%c1_103, %530, %c0_104], %533 {strides = array<i32>} : memref<2x8x128xf32, #tpu.memory_space<vmem>>, vector<1x8x128xf32>,
    %c1_i32_105 = arith.constant 1 : i32
    return
  }
  func.func @transform_0(%arg0: i32) -> (i32, i32) {
    %c0_i32 = arith.constant 0 : i32
    %c0_i32_0 = arith.constant 0 : i32
    return %arg0, %c0_i32 : i32, i32
  }
  func.func @transform_1(%arg0: i32) -> i32 {
    %c0_i32 = arith.constant 0 : i32
    %c0_i32_0 = arith.constant 0 : i32
    return %c0_i32 : i32
  }
  func.func @transform_2(%arg0: i32) -> i32 {
    %c0_i32 = arith.constant 0 : i32
    %c0_i32_0 = arith.constant 0 : i32
    return %c0_i32 : i32
  }
  func.func @transform_3(%arg0: i32) -> i32 {
    %c0_i32 = arith.constant 0 : i32
    %c0_i32_0 = arith.constant 0 : i32
    return %c0_i32 : i32
  }
  func.func @transform_4(%arg0: i32) -> i32 {
    %c0_i32 = arith.constant 0 : i32
    %c0_i32_0 = arith.constant 0 : i32
    return %c0_i32 : i32
  }
  func.func @transform_5(%arg0: i32) -> (i32, i32, i32) {
    %c0_i32 = arith.constant 0 : i32
    %c0_i32_0 = arith.constant 0 : i32
    %c0_i32_1 = arith.constant 0 : i32
    return %c0_i32, %arg0, %c0_i32_0 : i32, i32, i32
  }
}

</mosaic_0001>

<llo_original>
// kernel: tpu_custom_call.1
$region0: #{tpu_custom_call.1}
  #allocation0 [shape = 'u32[]', space=smem, size = 0x4, offset = 0x4, fixed_abs, tag = 'smem constant byte address 0x4 - core index']
  #allocation1 [shape = 'u32[72,128]{1,0:T(1,128)}', space=vmem, size = 0x9000, scoped, tag = 'internal scratch']
  %s0 = inlined_call_operand.hbm [shape: f32[8,128], index: 0, kind: input, shape index: {}]
  %s1 = inlined_call_operand.hbm [shape: f32[32], index: 1, kind: input, shape index: {}]
  %s2 = inlined_call_operand.vmem [shape: f32[32], index: 2, kind: input, shape index: {}]
  %s3 = inlined_call_operand.vmem [shape: f32[64], index: 3, kind: input, shape index: {}]
  %s4 = inlined_call_operand.vmem [shape: f32[2], index: 4, kind: input, shape index: {}]
  %s5 = inlined_call_operand.hbm [shape: f32[2,8,128], index: 5, kind: output, shape index: {}]
  %s6 = sld [smem:[#allocation0]]
  $region50: #{tpu_custom_call.1} parent=0
    _
  %s8 = ssub.s32 1, %s6
  %s9 = scalar_select 0, %s8, %s6
  $region1: #{tpu_custom_call.1} parent=0
    #allocation2 [shape = 'u8[4096]{0}', space=vmem, size = 0x1000, scoped, tag = 'input window, operand 0, single buffered']
    #allocation3 [shape = 's32[1]{0}', space=sflag, size = 0x4, scoped, tag = 'scoped memory for tpu_custom_call.1']
    #allocation4 [shape = 's32[1]{0}', space=sflag, size = 0x4, scoped, tag = 'scoped memory for tpu_custom_call.1']
    #allocation5 [shape = 's32[1]{0}', space=sflag, size = 0x4, scoped, tag = 'scoped memory for tpu_custom_call.1']
    #allocation6 [shape = 's32[1]{0}', space=sflag, size = 0x4, scoped, tag = 'scoped memory for tpu_custom_call.1']
    #allocation7 [shape = 'u8[512]{0}', space=smem, size = 0x200, scoped, tag = 'input window, operand 1, single buffered']
    #allocation8 [shape = 'u8[512]{0}', space=smem, size = 0x200, scoped, tag = 'input window, operand 2, single buffered']
    #allocation9 [shape = 'u8[512]{0}', space=smem, size = 0x200, scoped, tag = 'input window, operand 3, single buffered']
    #allocation10 [shape = 's32[1]{0}', space=sflag, size = 0x4, scoped, tag = 'scoped memory for tpu_custom_call.1']
    #allocation11 [shape = 'u8[512]{0}', space=smem, size = 0x200, scoped, tag = 'input window, operand 4, single buffered']
    #allocation12 [shape = 'u8[8192]{0}', space=vmem, size = 0x2000, scoped, tag = 'output window, operand 0, single buffered']
    %10 = vsyncpa [#allocation3], 0
    %11 = vsyncpa [#allocation5], 0
    %12 = vsyncpa [#allocation6], 0
    %13 = vsyncpa [#allocation10], 0
    %14 = vsyncpa [#allocation4], 0
    // Predicated region
    $region2: #{tpu_custom_call.1} parent=1 // pred_check
      _
    $region3: #{tpu_custom_call.1} parent=1 // pred_check_branch
      %16 = sbr.rel (0) target = $region5
    $region4: #{tpu_custom_call.1} parent=1 // pred_region
      %18 = vsyncadd [#allocation3], 0
      %s20 = sshll.u32 %s0, 4
      %s21 = int_to_ptr.hbm [resolvable:$true] %s20
      %s22 = sshll.u32 [#allocation2], 4
      %s23 = int_to_ptr.vmem [resolvable:$true] %s22
      %25 = dma.hbm_to_vmem [thread:$0]  %s21, 128, %s23, [#allocation3]
    $region5: #{tpu_custom_call.1} parent=1 // pred_fallthru
      _
    // Predicated region
    $region6: #{tpu_custom_call.1} parent=1 // pred_check
      _
    $region7: #{tpu_custom_call.1} parent=1 // pred_check_branch
      %27 = sbr.rel (0) target = $region9
    $region8: #{tpu_custom_call.1} parent=1 // pred_region
      %29 = vsyncadd [#allocation5], 0
      %s31 = sshll.u32 %s1, 4
      %s32 = int_to_ptr.hbm [resolvable:$true] %s31
      %34 = dma.hbm_to_smem %s32, 16, [#allocation7], [#allocation5]
    $region9: #{tpu_custom_call.1} parent=1 // pred_fallthru
      _
    // Predicated region
    $region10: #{tpu_custom_call.1} parent=1 // pred_check
      _
    $region11: #{tpu_custom_call.1} parent=1 // pred_check_branch
      %36 = sbr.rel (0) target = $region13
    $region12: #{tpu_custom_call.1} parent=1 // pred_region
      %38 = vsyncadd [#allocation6], 0
      %s40 = sshll.u32 %s2, 4
      %s41 = int_to_ptr.vmem [resolvable:$true] %s40
      %43 = dma.vmem_to_smem %s41, 16, [#allocation8], [#allocation6]
    $region13: #{tpu_custom_call.1} parent=1 // pred_fallthru
      _
    // Predicated region
    $region14: #{tpu_custom_call.1} parent=1 // pred_check
      _
    $region15: #{tpu_custom_call.1} parent=1 // pred_check_branch
      %45 = sbr.rel (0) target = $region17
    $region16: #{tpu_custom_call.1} parent=1 // pred_region
      %47 = vsyncadd [#allocation10], 0
      %s49 = sshll.u32 %s3, 4
      %s50 = int_to_ptr.vmem [resolvable:$true] %s49
      %52 = dma.vmem_to_smem %s50, 16, [#allocation9], [#allocation10]
    $region17: #{tpu_custom_call.1} parent=1 // pred_fallthru
      _
    // Predicated region
    $region18: #{tpu_custom_call.1} parent=1 // pred_check
      _
    $region19: #{tpu_custom_call.1} parent=1 // pred_check_branch
      %54 = sbr.rel (0) target = $region21
    $region20: #{tpu_custom_call.1} parent=1 // pred_region
      %56 = vsyncadd [#allocation10], 0
      %s58 = sshll.u32 %s4, 4
      %s59 = int_to_ptr.vmem [resolvable:$true] %s58
      %61 = dma.vmem_to_smem %s59, 16, [#allocation11], [#allocation10]
    $region21: #{tpu_custom_call.1} parent=1 // pred_fallthru
      _
    // Predicated region
    $region22: #{tpu_custom_call.1} parent=1 // pred_check
      _
    $region23: #{tpu_custom_call.1} parent=1 // pred_check_branch
      %63 = sbr.rel (0) target = $region25
    $region24: #{tpu_custom_call.1} parent=1 // pred_region
      %65 = dma.done [#allocation3], 128
    $region25: #{tpu_custom_call.1} parent=1 // pred_fallthru
      _
    // Predicated region
    $region26: #{tpu_custom_call.1} parent=1 // pred_check
      _
    $region27: #{tpu_custom_call.1} parent=1 // pred_check_branch
      %67 = sbr.rel (0) target = $region29
    $region28: #{tpu_custom_call.1} parent=1 // pred_region
      %69 = dma.done [#allocation5], 16
    $region29: #{tpu_custom_call.1} parent=1 // pred_fallthru
      _
    // Predicated region
    $region30: #{tpu_custom_call.1} parent=1 // pred_check
      _
    $region31: #{tpu_custom_call.1} parent=1 // pred_check_branch
      %71 = sbr.rel (0) target = $region33
    $region32: #{tpu_custom_call.1} parent=1 // pred_region
      %73 = dma.done [#allocation6], 16
    $region33: #{tpu_custom_call.1} parent=1 // pred_fallthru
      _
    // Predicated region
    $region34: #{tpu_custom_call.1} parent=1 // pred_check
      _
    $region35: #{tpu_custom_call.1} parent=1 // pred_check_branch
      %75 = sbr.rel (0) target = $region37
    $region36: #{tpu_custom_call.1} parent=1 // pred_region
      %77 = dma.done [#allocation10], 16
    $region37: #{tpu_custom_call.1} parent=1 // pred_fallthru
      _
    // Predicated region
    $region38: #{tpu_custom_call.1} parent=1 // pred_check
      _
    $region39: #{tpu_custom_call.1} parent=1 // pred_check_branch
      %79 = sbr.rel (0) target = $region41
    $region40: #{tpu_custom_call.1} parent=1 // pred_region
      %81 = dma.done [#allocation10], 16
    $region41: #{tpu_custom_call.1} parent=1 // pred_fallthru
      _
    %82 = sfence
    %s83 = sld [smem:[#allocation11]]
    %s84 = sld [smem:[#allocation11 + $0x1]]
    %v85 = vld [vmem:[#allocation2] sm:$0xff]
    %s86 = sld [smem:[#allocation7]]
    %v87 = vstv %s86
    %v88 = vmul.f32 %v85, %v87
    %s89 = sld [smem:[#allocation8]]
    %v90 = vstv %s89
    %v91 = vadd.f32 %v88, %v90
    %v92 = vmax.f32 %v91, 0.0
    %s93 = sld [smem:[#allocation9]]
    %v94 = vstv %s93
    %v95 = vmul.f32 %v92, %v94
    %v96 = vadd.f32 %v95, 0.0
    %s97 = sld [smem:[#allocation9 + $0x1]]
    %v98 = vstv %s97
    %v99 = vmul.f32 %v92, %v98
    %v100 = vadd.f32 %v99, 0.0
    %s101 = sld [smem:[#allocation7 + $0x1]]
    %v102 = vstv %s101
    %v103 = vmul.f32 %v85, %v102
    %s104 = sld [smem:[#allocation8 + $0x1]]
    %v105 = vstv %s104
    %v106 = vadd.f32 %v103, %v105
    %v107 = vmax.f32 %v106, 0.0
    %s108 = sld [smem:[#allocation9 + $0x2]]
    %v109 = vstv %s108
    %v110 = vmul.f32 %v107, %v109
    %v111 = vadd.f32 %v96, %v110
    %s112 = sld [smem:[#allocation9 + $0x3]]
    %v113 = vstv %s112
    %v114 = vmul.f32 %v107, %v113
    %v115 = vadd.f32 %v100, %v114
    %s116 = sld [smem:[#allocation7 + $0x2]]
    %v117 = vstv %s116
    %v118 = vmul.f32 %v85, %v117
    %s119 = sld [smem:[#allocation8 + $0x2]]
    %v120 = vstv %s119
    %v121 = vadd.f32 %v118, %v120
    %v122 = vmax.f32 %v121, 0.0
    %s123 = sld [smem:[#allocation9 + $0x4]]
    %v124 = vstv %s123
    %v125 = vmul.f32 %v122, %v124
    %v126 = vadd.f32 %v111, %v125
    %s127 = sld [smem:[#allocation9 + $0x5]]
    %v128 = vstv %s127
    %v129 = vmul.f32 %v122, %v128
    %v130 = vadd.f32 %v115, %v129
    %s131 = sld [smem:[#allocation7 + $0x3]]
    %v132 = vstv %s131
    %v133 = vmul.f32 %v85, %v132
    %s134 = sld [smem:[#allocation8 + $0x3]]
    %v135 = vstv %s134
    %v136 = vadd.f32 %v133, %v135
    %v137 = vmax.f32 %v136, 0.0
    %s138 = sld [smem:[#allocation9 + $0x6]]
    %v139 = vstv %s138
    %v140 = vmul.f32 %v137, %v139
    %v141 = vadd.f32 %v126, %v140
    %s142 = sld [smem:[#allocation9 + $0x7]]
    %v143 = vstv %s142
    %v144 = vmul.f32 %v137, %v143
    %v145 = vadd.f32 %v130, %v144
    %s146 = sld [smem:[#allocation7 + $0x4]]
    %v147 = vstv %s146
    %v148 = vmul.f32 %v85, %v147
    %s149 = sld [smem:[#allocation8 + $0x4]]
    %v150 = vstv %s149
    %v151 = vadd.f32 %v148, %v150
    %v152 = vmax.f32 %v151, 0.0
    %s153 = sld [smem:[#allocation9 + $0x8]]
    %v154 = vstv %s153
    %v155 = vmul.f32 %v152, %v154
    %v156 = vadd.f32 %v141, %v155
    %s157 = sld [smem:[#allocation9 + $0x9]]
    %v158 = vstv %s157
    %v159 = vmul.f32 %v152, %v158
    %v160 = vadd.f32 %v145, %v159
    %s161 = sld [smem:[#allocation7 + $0x5]]
    %v162 = vstv %s161
    %v163 = vmul.f32 %v85, %v162
    %s164 = sld [smem:[#allocation8 + $0x5]]
    %v165 = vstv %s164
    %v166 = vadd.f32 %v163, %v165
    %v167 = vmax.f32 %v166, 0.0
    %s168 = sld [smem:[#allocation9 + $0xa]]
    %v169 = vstv %s168
    %v170 = vmul.f32 %v167, %v169
    %v171 = vadd.f32 %v156, %v170
    %s172 = sld [smem:[#allocation9 + $0xb]]
    %v173 = vstv %s172
    %v174 = vmul.f32 %v167, %v173
    %v175 = vadd.f32 %v160, %v174
    %s176 = sld [smem:[#allocation7 + $0x6]]
    %v177 = vstv %s176
    %v178 = vmul.f32 %v85, %v177
    %s179 = sld [smem:[#allocation8 + $0x6]]
    %v180 = vstv %s179
    %v181 = vadd.f32 %v178, %v180
    %v182 = vmax.f32 %v181, 0.0
    %s183 = sld [smem:[#allocation9 + $0xc]]
    %v184 = vstv %s183
    %v185 = vmul.f32 %v182, %v184
    %v186 = vadd.f32 %v171, %v185
    %s187 = sld [smem:[#allocation9 + $0xd]]
    %v188 = vstv %s187
    %v189 = vmul.f32 %v182, %v188
    %v190 = vadd.f32 %v175, %v189
    %s191 = sld [smem:[#allocation7 + $0x7]]
    %v192 = vstv %s191
    %v193 = vmul.f32 %v85, %v192
    %s194 = sld [smem:[#allocation8 + $0x7]]
    %v195 = vstv %s194
    %v196 = vadd.f32 %v193, %v195
    %v197 = vmax.f32 %v196, 0.0
    %s198 = sld [smem:[#allocation9 + $0xe]]
    %v199 = vstv %s198
    %v200 = vmul.f32 %v197, %v199
    %v201 = vadd.f32 %v186, %v200
    %s202 = sld [smem:[#allocation9 + $0xf]]
    %v203 = vstv %s202
    %v204 = vmul.f32 %v197, %v203
    %v205 = vadd.f32 %v190, %v204
    %s206 = sld [smem:[#allocation7 + $0x8]]
    %v207 = vstv %s206
    %v208 = vmul.f32 %v85, %v207
    %s209 = sld [smem:[#allocation8 + $0x8]]
    %v210 = vstv %s209
    %v211 = vadd.f32 %v208, %v210
    %v212 = vmax.f32 %v211, 0.0
    %s213 = sld [smem:[#allocation9 + $0x10]]
    %v214 = vstv %s213
    %v215 = vmul.f32 %v212, %v214
    %v216 = vadd.f32 %v201, %v215
    %s217 = sld [smem:[#allocation9 + $0x11]]
    %v218 = vstv %s217
    %v219 = vmul.f32 %v212, %v218
    %v220 = vadd.f32 %v205, %v219
    %s221 = sld [smem:[#allocation7 + $0x9]]
    %v222 = vstv %s221
    %v223 = vmul.f32 %v85, %v222
    %s224 = sld [smem:[#allocation8 + $0x9]]
    %v225 = vstv %s224
    %v226 = vadd.f32 %v223, %v225
    %v227 = vmax.f32 %v226, 0.0
    %s228 = sld [smem:[#allocation9 + $0x12]]
    %v229 = vstv %s228
    %v230 = vmul.f32 %v227, %v229
    %v231 = vadd.f32 %v216, %v230
    %s232 = sld [smem:[#allocation9 + $0x13]]
    %v233 = vstv %s232
    %v234 = vmul.f32 %v227, %v233
    %v235 = vadd.f32 %v220, %v234
    %s236 = sld [smem:[#allocation7 + $0xa]]
    %v237 = vstv %s236
    %v238 = vmul.f32 %v85, %v237
    %s239 = sld [smem:[#allocation8 + $0xa]]
    %v240 = vstv %s239
    %v241 = vadd.f32 %v238, %v240
    %v242 = vmax.f32 %v241, 0.0
    %s243 = sld [smem:[#allocation9 + $0x14]]
    %v244 = vstv %s243
    %v245 = vmul.f32 %v242, %v244
    %v246 = vadd.f32 %v231, %v245
    %s247 = sld [smem:[#allocation9 + $0x15]]
    %v248 = vstv %s247
    %v249 = vmul.f32 %v242, %v248
    %v250 = vadd.f32 %v235, %v249
    %s251 = sld [smem:[#allocation7 + $0xb]]
    %v252 = vstv %s251
    %v253 = vmul.f32 %v85, %v252
    %s254 = sld [smem:[#allocation8 + $0xb]]
    %v255 = vstv %s254
    %v256 = vadd.f32 %v253, %v255
    %v257 = vmax.f32 %v256, 0.0
    %s258 = sld [smem:[#allocation9 + $0x16]]
    %v259 = vstv %s258
    %v260 = vmul.f32 %v257, %v259
    %v261 = vadd.f32 %v246, %v260
    %s262 = sld [smem:[#allocation9 + $0x17]]
    %v263 = vstv %s262
    %v264 = vmul.f32 %v257, %v263
    %v265 = vadd.f32 %v250, %v264
    %s266 = sld [smem:[#allocation7 + $0xc]]
    %v267 = vstv %s266
    %v268 = vmul.f32 %v85, %v267
    %s269 = sld [smem:[#allocation8 + $0xc]]
    %v270 = vstv %s269
    %v271 = vadd.f32 %v268, %v270
    %v272 = vmax.f32 %v271, 0.0
    %s273 = sld [smem:[#allocation9 + $0x18]]
    %v274 = vstv %s273
    %v275 = vmul.f32 %v272, %v274
    %v276 = vadd.f32 %v261, %v275
    %s277 = sld [smem:[#allocation9 + $0x19]]
    %v278 = vstv %s277
    %v279 = vmul.f32 %v272, %v278
    %v280 = vadd.f32 %v265, %v279
    %s281 = sld [smem:[#allocation7 + $0xd]]
    %v282 = vstv %s281
    %v283 = vmul.f32 %v85, %v282
    %s284 = sld [smem:[#allocation8 + $0xd]]
    %v285 = vstv %s284
    %v286 = vadd.f32 %v283, %v285
    %v287 = vmax.f32 %v286, 0.0
    %s288 = sld [smem:[#allocation9 + $0x1a]]
    %v289 = vstv %s288
    %v290 = vmul.f32 %v287, %v289
    %v291 = vadd.f32 %v276, %v290
    %s292 = sld [smem:[#allocation9 + $0x1b]]
    %v293 = vstv %s292
    %v294 = vmul.f32 %v287, %v293
    %v295 = vadd.f32 %v280, %v294
    %s296 = sld [smem:[#allocation7 + $0xe]]
    %v297 = vstv %s296
    %v298 = vmul.f32 %v85, %v297
    %s299 = sld [smem:[#allocation8 + $0xe]]
    %v300 = vstv %s299
    %v301 = vadd.f32 %v298, %v300
    %v302 = vmax.f32 %v301, 0.0
    %s303 = sld [smem:[#allocation9 + $0x1c]]
    %v304 = vstv %s303
    %v305 = vmul.f32 %v302, %v304
    %v306 = vadd.f32 %v291, %v305
    %s307 = sld [smem:[#allocation9 + $0x1d]]
    %v308 = vstv %s307
    %v309 = vmul.f32 %v302, %v308
    %v310 = vadd.f32 %v295, %v309
    %s311 = sld [smem:[#allocation7 + $0xf]]
    %v312 = vstv %s311
    %v313 = vmul.f32 %v85, %v312
    %s314 = sld [smem:[#allocation8 + $0xf]]
    %v315 = vstv %s314
    %v316 = vadd.f32 %v313, %v315
    %v317 = vmax.f32 %v316, 0.0
    %s318 = sld [smem:[#allocation9 + $0x1e]]
    %v319 = vstv %s318
    %v320 = vmul.f32 %v317, %v319
    %v321 = vadd.f32 %v306, %v320
    %s322 = sld [smem:[#allocation9 + $0x1f]]
    %v323 = vstv %s322
    %v324 = vmul.f32 %v317, %v323
    %v325 = vadd.f32 %v310, %v324
    %s326 = sld [smem:[#allocation7 + $0x10]]
    %v327 = vstv %s326
    %v328 = vmul.f32 %v85, %v327
    %s329 = sld [smem:[#allocation8 + $0x10]]
    %v330 = vstv %s329
    %v331 = vadd.f32 %v328, %v330
    %v332 = vmax.f32 %v331, 0.0
    %s333 = sld [smem:[#allocation9 + $0x20]]
    %v334 = vstv %s333
    %v335 = vmul.f32 %v332, %v334
    %v336 = vadd.f32 %v321, %v335
    %s337 = sld [smem:[#allocation9 + $0x21]]
    %v338 = vstv %s337
    %v339 = vmul.f32 %v332, %v338
    %v340 = vadd.f32 %v325, %v339
    %s341 = sld [smem:[#allocation7 + $0x11]]
    %v342 = vstv %s341
    %v343 = vmul.f32 %v85, %v342
    %s344 = sld [smem:[#allocation8 + $0x11]]
    %v345 = vstv %s344
    %v346 = vadd.f32 %v343, %v345
    %v347 = vmax.f32 %v346, 0.0
    %s348 = sld [smem:[#allocation9 + $0x22]]
    %v349 = vstv %s348
    %v350 = vmul.f32 %v347, %v349
    %v351 = vadd.f32 %v336, %v350
    %s352 = sld [smem:[#allocation9 + $0x23]]
    %v353 = vstv %s352
    %v354 = vmul.f32 %v347, %v353
    %v355 = vadd.f32 %v340, %v354
    %s356 = sld [smem:[#allocation7 + $0x12]]
    %v357 = vstv %s356
    %v358 = vmul.f32 %v85, %v357
    %s359 = sld [smem:[#allocation8 + $0x12]]
    %v360 = vstv %s359
    %v361 = vadd.f32 %v358, %v360
    %v362 = vmax.f32 %v361, 0.0
    %s363 = sld [smem:[#allocation9 + $0x24]]
    %v364 = vstv %s363
    %v365 = vmul.f32 %v362, %v364
    %v366 = vadd.f32 %v351, %v365
    %s367 = sld [smem:[#allocation9 + $0x25]]
    %v368 = vstv %s367
    %v369 = vmul.f32 %v362, %v368
    %v370 = vadd.f32 %v355, %v369
    %s371 = sld [smem:[#allocation7 + $0x13]]
    %v372 = vstv %s371
    %v373 = vmul.f32 %v85, %v372
    %s374 = sld [smem:[#allocation8 + $0x13]]
    %v375 = vstv %s374
    %v376 = vadd.f32 %v373, %v375
    %v377 = vmax.f32 %v376, 0.0
    %s378 = sld [smem:[#allocation9 + $0x26]]
    %v379 = vstv %s378
    %v380 = vmul.f32 %v377, %v379
    %v381 = vadd.f32 %v366, %v380
    %s382 = sld [smem:[#allocation9 + $0x27]]
    %v383 = vstv %s382
    %v384 = vmul.f32 %v377, %v383
    %v385 = vadd.f32 %v370, %v384
    %s386 = sld [smem:[#allocation7 + $0x14]]
    %v387 = vstv %s386
    %v388 = vmul.f32 %v85, %v387
    %s389 = sld [smem:[#allocation8 + $0x14]]
    %v390 = vstv %s389
    %v391 = vadd.f32 %v388, %v390
    %v392 = vmax.f32 %v391, 0.0
    %s393 = sld [smem:[#allocation9 + $0x28]]
    %v394 = vstv %s393
    %v395 = vmul.f32 %v392, %v394
    %v396 = vadd.f32 %v381, %v395
    %s397 = sld [smem:[#allocation9 + $0x29]]
    %v398 = vstv %s397
    %v399 = vmul.f32 %v392, %v398
    %v400 = vadd.f32 %v385, %v399
    %s401 = sld [smem:[#allocation7 + $0x15]]
    %v402 = vstv %s401
    %v403 = vmul.f32 %v85, %v402
    %s404 = sld [smem:[#allocation8 + $0x15]]
    %v405 = vstv %s404
    %v406 = vadd.f32 %v403, %v405
    %v407 = vmax.f32 %v406, 0.0
    %s408 = sld [smem:[#allocation9 + $0x2a]]
    %v409 = vstv %s408
    %v410 = vmul.f32 %v407, %v409
    %v411 = vadd.f32 %v396, %v410
    %s412 = sld [smem:[#allocation9 + $0x2b]]
    %v413 = vstv %s412
    %v414 = vmul.f32 %v407, %v413
    %v415 = vadd.f32 %v400, %v414
    %s416 = sld [smem:[#allocation7 + $0x16]]
    %v417 = vstv %s416
    %v418 = vmul.f32 %v85, %v417
    %s419 = sld [smem:[#allocation8 + $0x16]]
    %v420 = vstv %s419
    %v421 = vadd.f32 %v418, %v420
    %v422 = vmax.f32 %v421, 0.0
    %s423 = sld [smem:[#allocation9 + $0x2c]]
    %v424 = vstv %s423
    %v425 = vmul.f32 %v422, %v424
    %v426 = vadd.f32 %v411, %v425
    %s427 = sld [smem:[#allocation9 + $0x2d]]
    %v428 = vstv %s427
    %v429 = vmul.f32 %v422, %v428
    %v430 = vadd.f32 %v415, %v429
    %s431 = sld [smem:[#allocation7 + $0x17]]
    %v432 = vstv %s431
    %v433 = vmul.f32 %v85, %v432
    %s434 = sld [smem:[#allocation8 + $0x17]]
    %v435 = vstv %s434
    %v436 = vadd.f32 %v433, %v435
    %v437 = vmax.f32 %v436, 0.0
    %s438 = sld [smem:[#allocation9 + $0x2e]]
    %v439 = vstv %s438
    %v440 = vmul.f32 %v437, %v439
    %v441 = vadd.f32 %v426, %v440
    %s442 = sld [smem:[#allocation9 + $0x2f]]
    %v443 = vstv %s442
    %v444 = vmul.f32 %v437, %v443
    %v445 = vadd.f32 %v430, %v444
    %s446 = sld [smem:[#allocation7 + $0x18]]
    %v447 = vstv %s446
    %v448 = vmul.f32 %v85, %v447
    %s449 = sld [smem:[#allocation8 + $0x18]]
    %v450 = vstv %s449
    %v451 = vadd.f32 %v448, %v450
    %v452 = vmax.f32 %v451, 0.0
    %s453 = sld [smem:[#allocation9 + $0x30]]
    %v454 = vstv %s453
    %v455 = vmul.f32 %v452, %v454
    %v456 = vadd.f32 %v441, %v455
    %s457 = sld [smem:[#allocation9 + $0x31]]
    %v458 = vstv %s457
    %v459 = vmul.f32 %v452, %v458
    %v460 = vadd.f32 %v445, %v459
    %s461 = sld [smem:[#allocation7 + $0x19]]
    %v462 = vstv %s461
    %v463 = vmul.f32 %v85, %v462
    %s464 = sld [smem:[#allocation8 + $0x19]]
    %v465 = vstv %s464
    %v466 = vadd.f32 %v463, %v465
    %v467 = vmax.f32 %v466, 0.0
    %s468 = sld [smem:[#allocation9 + $0x32]]
    %v469 = vstv %s468
    %v470 = vmul.f32 %v467, %v469
    %v471 = vadd.f32 %v456, %v470
    %s472 = sld [smem:[#allocation9 + $0x33]]
    %v473 = vstv %s472
    %v474 = vmul.f32 %v467, %v473
    %v475 = vadd.f32 %v460, %v474
    %s476 = sld [smem:[#allocation7 + $0x1a]]
    %v477 = vstv %s476
    %v478 = vmul.f32 %v85, %v477
    %s479 = sld [smem:[#allocation8 + $0x1a]]
    %v480 = vstv %s479
    %v481 = vadd.f32 %v478, %v480
    %v482 = vmax.f32 %v481, 0.0
    %s483 = sld [smem:[#allocation9 + $0x34]]
    %v484 = vstv %s483
    %v485 = vmul.f32 %v482, %v484
    %v486 = vadd.f32 %v471, %v485
    %s487 = sld [smem:[#allocation9 + $0x35]]
    %v488 = vstv %s487
    %v489 = vmul.f32 %v482, %v488
    %v490 = vadd.f32 %v475, %v489
    %s491 = sld [smem:[#allocation7 + $0x1b]]
    %v492 = vstv %s491
    %v493 = vmul.f32 %v85, %v492
    %s494 = sld [smem:[#allocation8 + $0x1b]]
    %v495 = vstv %s494
    %v496 = vadd.f32 %v493, %v495
    %v497 = vmax.f32 %v496, 0.0
    %s498 = sld [smem:[#allocation9 + $0x36]]
    %v499 = vstv %s498
    %v500 = vmul.f32 %v497, %v499
    %v501 = vadd.f32 %v486, %v500
    %s502 = sld [smem:[#allocation9 + $0x37]]
    %v503 = vstv %s502
    %v504 = vmul.f32 %v497, %v503
    %v505 = vadd.f32 %v490, %v504
    %s506 = sld [smem:[#allocation7 + $0x1c]]
    %v507 = vstv %s506
    %v508 = vmul.f32 %v85, %v507
    %s509 = sld [smem:[#allocation8 + $0x1c]]
    %v510 = vstv %s509
    %v511 = vadd.f32 %v508, %v510
    %v512 = vmax.f32 %v511, 0.0
    %s513 = sld [smem:[#allocation9 + $0x38]]
    %v514 = vstv %s513
    %v515 = vmul.f32 %v512, %v514
    %v516 = vadd.f32 %v501, %v515
    %s517 = sld [smem:[#allocation9 + $0x39]]
    %v518 = vstv %s517
    %v519 = vmul.f32 %v512, %v518
    %v520 = vadd.f32 %v505, %v519
    %s521 = sld [smem:[#allocation7 + $0x1d]]
    %v522 = vstv %s521
    %v523 = vmul.f32 %v85, %v522
    %s524 = sld [smem:[#allocation8 + $0x1d]]
    %v525 = vstv %s524
    %v526 = vadd.f32 %v523, %v525
    %v527 = vmax.f32 %v526, 0.0
    %s528 = sld [smem:[#allocation9 + $0x3a]]
    %v529 = vstv %s528
    %v530 = vmul.f32 %v527, %v529
    %v531 = vadd.f32 %v516, %v530
    %s532 = sld [smem:[#allocation9 + $0x3b]]
    %v533 = vstv %s532
    %v534 = vmul.f32 %v527, %v533
    %v535 = vadd.f32 %v520, %v534
    %s536 = sld [smem:[#allocation7 + $0x1e]]
    %v537 = vstv %s536
    %v538 = vmul.f32 %v85, %v537
    %s539 = sld [smem:[#allocation8 + $0x1e]]
    %v540 = vstv %s539
    %v541 = vadd.f32 %v538, %v540
    %v542 = vmax.f32 %v541, 0.0
    %s543 = sld [smem:[#allocation9 + $0x3c]]
    %v544 = vstv %s543
    %v545 = vmul.f32 %v542, %v544
    %v546 = vadd.f32 %v531, %v545
    %s547 = sld [smem:[#allocation9 + $0x3d]]
    %v548 = vstv %s547
    %v549 = vmul.f32 %v542, %v548
    %v550 = vadd.f32 %v535, %v549
    %s551 = sld [smem:[#allocation7 + $0x1f]]
    %v552 = vstv %s551
    %v553 = vmul.f32 %v85, %v552
    %s554 = sld [smem:[#allocation8 + $0x1f]]
    %v555 = vstv %s554
    %v556 = vadd.f32 %v553, %v555
    %v557 = vmax.f32 %v556, 0.0
    %s558 = sld [smem:[#allocation9 + $0x3e]]
    %v559 = vstv %s558
    %v560 = vmul.f32 %v557, %v559
    %v561 = vadd.f32 %v546, %v560
    %s562 = sld [smem:[#allocation9 + $0x3f]]
    %v563 = vstv %s562
    %v564 = vmul.f32 %v557, %v563
    %v565 = vadd.f32 %v550, %v564
    %v566 = vstv %s83
    %v567 = vadd.f32 %v561, %v566
    %568 = vst [vmem:[#allocation12] sm:$0xff] %v567
    %v569 = vstv %s84
    %v570 = vadd.f32 %v565, %v569
    %s571 = sadd.s32 0, 8
    %s572 = scalar_lea.vmem [#allocation12], %s571
    %573 = vst [vmem:[%s572] sm:$0xff] %v570
    // Predicated region
    $region42: #{tpu_custom_call.1} parent=1 // pred_check
      _
    $region43: #{tpu_custom_call.1} parent=1 // pred_check_branch
      %575 = sbr.rel (0) target = $region45
    $region44: #{tpu_custom_call.1} parent=1 // pred_region
      %577 = vsyncadd [#allocation4], 0
      %s578 = sshll.u32 [#allocation12], 4
      %s579 = int_to_ptr.vmem [resolvable:$true] %s578
      %s580 = sshll.u32 %s5, 4
      %s581 = int_to_ptr.hbm [resolvable:$true] %s580
      %586 = dma.vmem_to_hbm [thread:$0]  %s579, 256, %s581, [#allocation4], 128, 128, 8
    $region45: #{tpu_custom_call.1} parent=1 // pred_fallthru
      _
    // Predicated region
    $region46: #{tpu_custom_call.1} parent=1 // pred_check
      _
    $region47: #{tpu_custom_call.1} parent=1 // pred_check_branch
      %588 = sbr.rel (0) target = $region49
    $region48: #{tpu_custom_call.1} parent=1 // pred_region
      %590 = dma.done [#allocation4], 256
    $region49: #{tpu_custom_call.1} parent=1 // pred_fallthru
      _
    %591 = vsyncpa [#allocation3], 1
    %592 = vsyncpa [#allocation4], 1
    %593 = vsyncpa [#allocation5], 1
    %594 = vsyncpa [#allocation6], 1
    %595 = vsyncpa [#allocation10], 1

</llo_original>
